<compile_context>
chip_gen: v5e
topology: v5e:2x2
jax: 0.10.0
libtpu: 0.0.40
codegen_flags: <defaults>
</compile_context>

<pallas_src>
import math

import jax
import jax.numpy as jnp
from jax import lax
from jax.experimental import pallas as pl
from jax.experimental.pallas import tpu as pltpu


def _round_up(x, m):
    return (x + m - 1) // m * m


def _cdiv(a, b):
    return -(-a // b)


# ---------------------------------------------------------------------------
# Kernel
# ---------------------------------------------------------------------------
def _mlp_kernel(x_ref, w1_ref, b1_ref, w2_ref, b2_ref, o_ref, acc_ref):
    """One (row-tile, hidden-block) grid step of Linear -> GELU -> Linear.

    x_ref  : (TM, D_in)      w1_ref : (D_in, TK)     b1_ref : (1, TK)
    w2_ref : (TK, D_out_p)   b2_ref : (1, D_out_p)
    o_ref  : (TM, D_out_p)   acc_ref: (TM, D_out_p) f32 scratch
    Grid axis 1 (hidden blocks) is the fc2 reduction axis.
    """
    k = pl.program_id(1)

    @pl.when(k == 0)
    def _():
        acc_ref[...] = jnp.zeros_like(acc_ref)

    # fc1: operands in the (narrow) weight dtype on the MXU, f32 accumulation.
    h = jnp.dot(x_ref[...].astype(w1_ref.dtype), w1_ref[...],
                preferred_element_type=jnp.float32)
    h = h + b1_ref[...].astype(jnp.float32)

    # Exact erf GELU (== PyTorch nn.GELU default), evaluated in f32.
    # (Switch to bf16/tanh-approx only if profiling shows the VALU slot binding.)
    h = 0.5 * h * (1.0 + lax.erf(h * (1.0 / math.sqrt(2.0))))

    # fc2 partial product for this hidden block, accumulated in f32.
    acc_ref[...] += jnp.dot(h.astype(w2_ref.dtype), w2_ref[...],
                            preferred_element_type=jnp.float32)

    @pl.when(k == pl.num_programs(1) - 1)
    def _():
        out = acc_ref[...] + b2_ref[...].astype(jnp.float32)
        # Dropout(p=0.0) is the identity in the forward pass.
        o_ref[...] = out.astype(o_ref.dtype)


# ---------------------------------------------------------------------------
# One-time feature probe: can this jax lower pipeline_mode=pl.Buffered(1)?
# (Probe only; the real MLP pallas_call is never wrapped in a try/except.)
# ---------------------------------------------------------------------------
_BUFFERED_1_SUPPORTED = None


def _single_buffer_supported():
    global _BUFFERED_1_SUPPORTED
    if _BUFFERED_1_SUPPORTED is None:
        try:
            def _k(x_ref, w_ref, o_ref):
                o_ref[...] = x_ref[...] + w_ref[...]

            probe = pl.pallas_call(
                _k,
                out_shape=jax.ShapeDtypeStruct((8, 128), jnp.float32),
                grid_spec=pltpu.PrefetchScalarGridSpec(
                    num_scalar_prefetch=0,
                    grid=(1,),
                    in_specs=[
                        pl.BlockSpec((8, 128), lambda i: (i, 0)),
                        pl.BlockSpec((8, 128), lambda i: (0, 0),
                                     pipeline_mode=pl.Buffered(1)),
                    ],
                    out_specs=pl.BlockSpec((8, 128), lambda i: (i, 0)),
                ),
            )
            arg = jax.ShapeDtypeStruct((8, 128), jnp.float32)
            jax.jit(probe).lower(arg, arg)  # trace + Mosaic lowering only
            _BUFFERED_1_SUPPORTED = True
        except Exception:
            _BUFFERED_1_SUPPORTED = False
    return _BUFFERED_1_SUPPORTED


# ---------------------------------------------------------------------------
# VMEM / tiling policy
# ---------------------------------------------------------------------------
def _vmem_budget_bytes():
    """Generation-aware (capacity, safe request budget)."""
    cap = None
    try:
        info = pltpu.get_tpu_info()
        cap = int(getattr(info, "vmem_capacity_bytes", 0)) or None
    except Exception:
        cap = None
    if cap is None:
        cap = 64 * 1024 * 1024  # conservative: v7x per-TensorCore VMEM
    headroom = max(8 * 1024 * 1024, cap // 8)  # Mosaic scratch / spill headroom
    return cap, cap - headroom                 # v7x: ~56 MiB, v5e/v6e: ~112 MiB


def _select_tiling(M, D_in, D_hid, D_out_p, xbytes, wbytes, budget, tm_req,
                   hidden_block):
    """Pick (row tile, hidden block, weight buffer count, est. VMEM need)."""
    sublane = 8 * max(1, 4 // xbytes)  # f32 -> 8 rows/vreg, bf16 -> 16

    def vmem_need(tm_, tk_, wbufs_):
        w = wbufs_ * (D_in * tk_ + tk_ * D_out_p + tk_ + D_out_p) * wbytes
        act = 2 * tm_ * D_in * xbytes + 2 * tm_ * D_out_p * xbytes  # dbl-buffered tiles
        f32 = tm_ * tk_ * 4 + tm_ * D_out_p * 4                    # GELU tmp + accumulator
        return w + act + f32

    # Row tile: large (amortizes ~0.35us/step overhead), sublane aligned, no bigger
    # than the (rounded) row count.
    tm = max(sublane, min(_round_up(tm_req, sublane), _round_up(M, sublane)))
    # Guarantee >= 2 row tiles when M allows, so both v7x TensorCores get work.
    if _cdiv(_round_up(M, sublane), tm) < 2 and M >= 2 * sublane:
        tm = min(tm, _round_up(_cdiv(M, 2), sublane))

    if hidden_block is not None:
        if hidden_block >= D_hid:
            tk, wbufs = D_hid, 1
        else:
            tk, wbufs = min(_round_up(hidden_block, 128), _round_up(D_hid, 128)), 2
        return tm, tk, wbufs, vmem_need(tm, tk, wbufs)

    tk, wbufs = D_hid, 1  # weights fully resident, single-buffered
    # Shrink the row tile first (the tm x D_hid f32 GELU tmp bites first on v7x)...
    tm_floor = max(sublane, min(tm, 256))
    while vmem_need(tm, tk, wbufs) > budget and tm > tm_floor:
        tm = max(tm_floor, _round_up(tm // 2, sublane))
    # ...then stream hidden blocks (double-buffered) if residency still doesn't fit.
    if vmem_need(tm, tk, wbufs) > budget and D_hid > 128:
        wbufs = 2
        tk = _round_up(D_hid, 128)
        while tk > 128 and vmem_need(tm, tk, wbufs) > budget:
            tk = max(128, _round_up(tk // 2, 128))
    while vmem_need(tm, tk, wbufs) > budget and tm > sublane:
        tm = max(sublane, _round_up(tm // 2, sublane))

    return tm, tk, wbufs, vmem_need(tm, tk, wbufs)


# ---------------------------------------------------------------------------
# Public wrapper
# ---------------------------------------------------------------------------
def mlp_forward(x, w1, b1, w2, b2, *, tm=512, cast_weights_to_bf16=True,
                hidden_block=None, vmem_limit_bytes=None):
    """x: (..., D_in) -> (..., D_out). Parameters follow the x @ W + b convention
    (== PyTorch x @ W.T + b)."""
    D_in = x.shape[-1]
    assert w1.shape[0] == D_in
    D_hid = w1.shape[1]
    assert w2.shape[0] == D_hid
    D_out = w2.shape[1]
    lead = x.shape[:-1]
    M = int(math.prod(lead)) if lead else 1

    # Biggest single lever: bf16 weights keep the fast MXU path everywhere and
    # halve resident-weight VMEM + weight DMA bytes; accumulation stays f32.
    # Biases keep their original dtype (negligible bytes, better precision).
    if cast_weights_to_bf16 and w1.dtype == jnp.float32:
        w1 = w1.astype(jnp.bfloat16)
    if cast_weights_to_bf16 and w2.dtype == jnp.float32:
        w2 = w2.astype(jnp.bfloat16)

    xbytes = jnp.dtype(x.dtype).itemsize
    wbytes = max(jnp.dtype(w1.dtype).itemsize, jnp.dtype(w2.dtype).itemsize)

    # Lane-dense output: pad D_out to a multiple of 128 (unmasked vst stores);
    # padded columns are zero and sliced off after the call.
    D_out_p = _round_up(D_out, 128) if D_out % 128 else D_out

    cap, budget = _vmem_budget_bytes()
    tm_, tk, wbufs, need = _select_tiling(M, D_in, D_hid, D_out_p, xbytes, wbytes,
                                          budget, tm, hidden_block)

    D_hid_p = _round_up(D_hid, tk)
    nh = D_hid_p // tk
    M_pad = _round_up(M, tm_)

    x2 = x.reshape(M, D_in)
    if M_pad != M:
        x2 = jnp.pad(x2, ((0, M_pad - M), (0, 0)))

    b1_2 = b1.reshape(1, D_hid)
    b2_2 = b2.reshape(1, D_out)
    if D_hid_p != D_hid:
        # Zero-padded hidden columns: gelu(0 + 0) == 0, so they contribute nothing.
        w1 = jnp.pad(w1, ((0, 0), (0, D_hid_p - D_hid)))
        b1_2 = jnp.pad(b1_2, ((0, 0), (0, D_hid_p - D_hid)))
        w2 = jnp.pad(w2, ((0, D_hid_p - D_hid), (0, 0)))
    if D_out_p != D_out:
        w2 = jnp.pad(w2, ((0, 0), (0, D_out_p - D_out)))
        b2_2 = jnp.pad(b2_2, ((0, 0), (0, D_out_p - D_out)))

    if vmem_limit_bytes is None:
        vmem_limit_bytes = min(budget, max(2 * need, 16 * 1024 * 1024))
        vmem_limit_bytes = max(vmem_limit_bytes, need)
        vmem_limit_bytes = min(vmem_limit_bytes, cap - 2 * 1024 * 1024)
    vmem_limit_bytes = int(vmem_limit_bytes)

    param_bytes = int(w1.size * w1.dtype.itemsize + b1_2.size * b1_2.dtype.itemsize
                      + w2.size * w2.dtype.itemsize + b2_2.size * b2_2.dtype.itemsize)
    weight_passes = 1 if nh == 1 else M_pad // tm_  # streamed weights re-read per row tile
    cost = pl.CostEstimate(
        flops=2 * M_pad * (D_in * D_hid_p + D_hid_p * D_out_p),
        transcendentals=M_pad * D_hid_p,  # one erf per hidden activation
        bytes_accessed=weight_passes * param_bytes
                       + M_pad * D_in * xbytes + M_pad * D_out_p * xbytes,
    )

    # Weights/biases with constant index maps are held in a single VMEM buffer
    # (halves footprint vs default double-buffering); when the hidden dim is
    # split they stream, so default double-buffering keeps their DMA overlapped.
    weight_mode = pl.Buffered(1) if (nh == 1 and _single_buffer_supported()) else None
    wkw = {"pipeline_mode": weight_mode} if weight_mode is not None else {}

    in_specs = [
        pl.BlockSpec((tm_, D_in), lambda i, k: (i, 0)),
        pl.BlockSpec((D_in, tk), lambda i, k: (0, k), **wkw),
        pl.BlockSpec((1, tk), lambda i, k: (0, k), **wkw),
        pl.BlockSpec((tk, D_out_p), lambda i, k: (k, 0), **wkw),
        pl.BlockSpec((1, D_out_p), lambda i, k: (0, 0), **wkw),
    ]
    out_specs = pl.BlockSpec((tm_, D_out_p), lambda i, k: (i, 0))

    call = pl.pallas_call(
        _mlp_kernel,
        out_shape=jax.ShapeDtypeStruct((M_pad, D_out_p), x.dtype),
        grid_spec=pltpu.PrefetchScalarGridSpec(
            num_scalar_prefetch=0,
            grid=(M_pad // tm_, nh),
            in_specs=in_specs,
            out_specs=out_specs,
            scratch_shapes=[pltpu.VMEM((tm_, D_out_p), jnp.float32)],
        ),
        compiler_params=pltpu.CompilerParams(
            dimension_semantics=("parallel", "arbitrary"),
            vmem_limit_bytes=vmem_limit_bytes,
        ),
        cost_estimate=cost,
    )
    out = call(x2, w1, b1_2, w2, b2_2)

    if D_out_p != D_out:
        out = out[:, :D_out]
    if M_pad != M:
        out = out[:M]
    return out.reshape(*lead, D_out)


# ---------------------------------------------------------------------------
# Reference & init helpers
# ---------------------------------------------------------------------------
def mlp_reference(x, w1, b1, w2, b2):
    """Plain-JAX reference mirroring the kernel's dtype handling
    (operands in the weight dtype, f32 accumulation, exact erf GELU)."""
    h = jnp.dot(x.astype(w1.dtype), w1, preferred_element_type=jnp.float32)
    h = h + b1.astype(jnp.float32)
    h = 0.5 * h * (1.0 + lax.erf(h / math.sqrt(2.0)))
    out = jnp.dot(h.astype(w2.dtype), w2, preferred_element_type=jnp.float32)
    out = out + b2.astype(jnp.float32)
    return out.astype(x.dtype)


def init_mlp_params(key, input_dim, hidden_dim, output_dim, dtype=jnp.float32):
    """Deterministic init mimicking nn.Linear (uniform +-1/sqrt(fan_in)).
    Weights stored as (in, out) so the kernel computes x @ W + b."""
    k1, k2, k3, k4 = jax.random.split(key, 4)
    lim1 = 1.0 / math.sqrt(input_dim)
    lim2 = 1.0 / math.sqrt(hidden_dim)
    w1 = jax.random.uniform(k1, (input_dim, hidden_dim), dtype, -lim1, lim1)
    b1 = jax.random.uniform(k2, (hidden_dim,), dtype, -lim1, lim1)
    w2 = jax.random.uniform(k3, (hidden_dim, output_dim), dtype, -lim2, lim2)
    b2 = jax.random.uniform(k4, (output_dim,), dtype, -lim2, lim2)
    return w1, b1, w2, b2


if __name__ == "__main__":
    input_dim, hidden_dim = 32, 64
    output_dim = input_dim  # module default: output_dim = input_dim

    key = jax.random.PRNGKey(0)
    kx, kp, kx2, kp2, kx3 = jax.random.split(key, 5)
    w1, b1, w2, b2 = init_mlp_params(kp, input_dim, hidden_dim, output_dim)

    # Small ViT-like token batch: (batch=2, seq=8, dim=32).
    x = jax.random.normal(kx, (2, 8, input_dim), jnp.float32)

    # 1) Exact f32-weight path vs f32 reference.
    out_f32 = mlp_forward(x, w1, b1, w2, b2, cast_weights_to_bf16=False)
    jax.block_until_ready(out_f32)
    ref_f32 = mlp_reference(x, w1, b1, w2, b2)
    assert out_f32.shape == ref_f32.shape
    assert jnp.allclose(out_f32, ref_f32, atol=1e-5, rtol=1e-5)

    # 2) Default path: f32 weights cast to bf16 (fast MXU path, f32 accumulation).
    out_bf = mlp_forward(x, w1, b1, w2, b2)
    jax.block_until_ready(out_bf)
    ref_bf = mlp_reference(x, w1.astype(jnp.bfloat16), b1,
                           w2.astype(jnp.bfloat16), b2)
    assert jnp.allclose(out_bf, ref_bf, atol=1e-2, rtol=1e-2)
    assert jnp.allclose(out_bf, ref_f32, atol=3e-2, rtol=3e-2)

    # 3) Ragged token count (padded row tiles, no divisibility assert).
    x_r = jax.random.normal(kx2, (2, 13, input_dim), jnp.float32)
    out_r = mlp_forward(x_r, w1, b1, w2, b2, cast_weights_to_bf16=False)
    jax.block_until_ready(out_r)
    assert jnp.allclose(out_r, mlp_reference(x_r, w1, b1, w2, b2),
                        atol=1e-5, rtol=1e-5)

    # 4) Forced hidden-dim split (fc2 VMEM accumulator path) + lane-dense D_out pad.
    w1b, b1b, w2b, b2b = init_mlp_params(kp2, 32, 256, 32)
    x_b = jax.random.normal(kx3, (2, 8, 32), jnp.float32)
    out_split = mlp_forward(x_b, w1b, b1b, w2b, b2b,
                            cast_weights_to_bf16=False, hidden_block=128)
    jax.block_until_ready(out_split)
    assert jnp.allclose(out_split, mlp_reference(x_b, w1b, b1b, w2b, b2b),
                        atol=1e-4, rtol=1e-4)

    print("KERNEL_OK")
</pallas_src>

<mosaic_0001>
module attributes {stable_mosaic.version = 11 : i64} {
  func.func @_mlp_kernel(%arg0: i32, %arg1: i32, %arg2: memref<8x32xf32, #tpu.memory_space<vmem>>, %arg3: memref<32x64xf32, #tpu.memory_space<vmem>>, %arg4: memref<1x64xf32, #tpu.memory_space<vmem>>, %arg5: memref<64x128xf32, #tpu.memory_space<vmem>>, %arg6: memref<1x128xf32, #tpu.memory_space<vmem>>, %arg7: memref<8x128xf32, #tpu.memory_space<vmem>>, %arg8: memref<8x128xf32, #tpu.memory_space<vmem>>) attributes {dimension_semantics = [#tpu.dimension_semantics<parallel>, #tpu.dimension_semantics<arbitrary>], iteration_bounds = array<i64: 2, 1>, scalar_prefetch = 0 : i64, scratch_operands = 1 : i64, tpu.core_type = #tpu.core_type<tc>, window_params = [{transform_indices = @transform_0, window_bounds = array<i64: 8, 32>}, {transform_indices = @transform_1, window_bounds = array<i64: 32, 64>}, {transform_indices = @transform_2, window_bounds = array<i64: 1, 64>}, {transform_indices = @transform_3, window_bounds = array<i64: 64, 128>}, {pipeline_mode = #tpu.pipeline_mode<synchronous>, transform_indices = @transform_4, window_bounds = array<i64: 1, 128>}, {transform_indices = @transform_5, window_bounds = array<i64: 8, 128>}]} {
    %c0_i32 = arith.constant 0 : i32
    %0 = arith.cmpi eq, %arg1, %c0_i32 : i32
    %1 = arith.extui %0 : i1 to i32
    %c0_i32_0 = arith.constant 0 : i32
    %2 = arith.cmpi ne, %1, %c0_i32_0 : i32
    scf.if %2 {
      %cst_18 = arith.constant 0.000000e+00 : f32
      %25 = vector.broadcast %cst_18 : f32 to vector<8x128xf32>
      %c0_19 = arith.constant 0 : index
      %c0_20 = arith.constant 0 : index
      %26 = vector.load %arg8[%c0_19, %c0_20] : memref<8x128xf32, #tpu.memory_space<vmem>>, vector<8x128xf32>
      tpu.vector_store %arg8[%c0_19, %c0_20], %25 {strides = array<i32>} : memref<8x128xf32, #tpu.memory_space<vmem>>, vector<8x128xf32>,
    } else {
    }
    %c0 = arith.constant 0 : index
    %c0_1 = arith.constant 0 : index
    %3 = vector.load %arg2[%c0, %c0_1] : memref<8x32xf32, #tpu.memory_space<vmem>>, vector<8x32xf32>
    %c0_2 = arith.constant 0 : index
    %c0_3 = arith.constant 0 : index
    %4 = vector.load %arg3[%c0_2, %c0_3] : memref<32x64xf32, #tpu.memory_space<vmem>>, vector<32x64xf32>
    %cst = arith.constant dense<0.000000e+00> : vector<8x64xf32>
    %5 = tpu.matmul %3, %4, %cst {dimension_numbers = #tpu.dot_dimension_numbers<[1], [0], [0], [1], [0, 0, 1, 1], [], []>} : vector<8x32xf32>, vector<32x64xf32>, vector<8x64xf32> -> vector<8x64xf32>
    %c0_4 = arith.constant 0 : index
    %c0_5 = arith.constant 0 : index
    %6 = vector.load %arg4[%c0_4, %c0_5] : memref<1x64xf32, #tpu.memory_space<vmem>>, vector<1x64xf32>
    %7 = vector.broadcast %6 : vector<1x64xf32> to vector<8x64xf32>
    %8 = arith.addf %5, %7 : vector<8x64xf32>
    %cst_6 = arith.constant 5.000000e-01 : f32
    %9 = vector.broadcast %cst_6 : f32 to vector<8x64xf32>
    %10 = arith.mulf %9, %8 : vector<8x64xf32>
    %cst_7 = arith.constant 0.707106769 : f32
    %11 = vector.broadcast %cst_7 : f32 to vector<8x64xf32>
    %12 = arith.mulf %8, %11 : vector<8x64xf32>
    %13 = math.erf %12 : vector<8x64xf32>
    %cst_8 = arith.constant 1.000000e+00 : f32
    %14 = vector.broadcast %cst_8 : f32 to vector<8x64xf32>
    %15 = arith.addf %14, %13 : vector<8x64xf32>
    %16 = arith.mulf %10, %15 : vector<8x64xf32>
    %c0_9 = arith.constant 0 : index
    %c0_10 = arith.constant 0 : index
    %17 = vector.load %arg8[%c0_9, %c0_10] : memref<8x128xf32, #tpu.memory_space<vmem>>, vector<8x128xf32>
    %c0_11 = arith.constant 0 : index
    %c0_12 = arith.constant 0 : index
    %18 = vector.load %arg5[%c0_11, %c0_12] : memref<64x128xf32, #tpu.memory_space<vmem>>, vector<64x128xf32>
    %cst_13 = arith.constant dense<0.000000e+00> : vector<8x128xf32>
    %19 = tpu.matmul %16, %18, %cst_13 {dimension_numbers = #tpu.dot_dimension_numbers<[1], [0], [0], [1], [0, 0, 1, 1], [], []>} : vector<8x64xf32>, vector<64x128xf32>, vector<8x128xf32> -> vector<8x128xf32>
    %20 = arith.addf %17, %19 : vector<8x128xf32>
    %c0_14 = arith.constant 0 : index
    %c0_15 = arith.constant 0 : index
    %21 = vector.load %arg8[%c0_14, %c0_15] : memref<8x128xf32, #tpu.memory_space<vmem>>, vector<8x128xf32>
    tpu.vector_store %arg8[%c0_14, %c0_15], %20 {strides = array<i32>} : memref<8x128xf32, #tpu.memory_space<vmem>>, vector<8x128xf32>,
    %c0_i32_16 = arith.constant 0 : i32
    %22 = arith.cmpi eq, %arg1, %c0_i32_16 : i32
    %23 = arith.extui %22 : i1 to i32
    %c0_i32_17 = arith.constant 0 : i32
    %24 = arith.cmpi ne, %23, %c0_i32_17 : i32
    scf.if %24 {
      %c0_18 = arith.constant 0 : index
      %c0_19 = arith.constant 0 : index
      %25 = vector.load %arg8[%c0_18, %c0_19] : memref<8x128xf32, #tpu.memory_space<vmem>>, vector<8x128xf32>
      %c0_20 = arith.constant 0 : index
      %c0_21 = arith.constant 0 : index
      %26 = vector.load %arg6[%c0_20, %c0_21] : memref<1x128xf32, #tpu.memory_space<vmem>>, vector<1x128xf32>
      %27 = vector.broadcast %26 : vector<1x128xf32> to vector<8x128xf32>
      %28 = arith.addf %25, %27 : vector<8x128xf32>
      %c0_22 = arith.constant 0 : index
      %c0_23 = arith.constant 0 : index
      %29 = vector.load %arg7[%c0_22, %c0_23] : memref<8x128xf32, #tpu.memory_space<vmem>>, vector<8x128xf32>
      tpu.vector_store %arg7[%c0_22, %c0_23], %28 {strides = array<i32>} : memref<8x128xf32, #tpu.memory_space<vmem>>, vector<8x128xf32>,
    } else {
    }
    return
  }
  func.func @transform_0(%arg0: i32, %arg1: i32) -> (i32, i32) {
    %c0_i32 = arith.constant 0 : i32
    %c0_i32_0 = arith.constant 0 : i32
    return %arg0, %c0_i32 : i32, i32
  }
  func.func @transform_1(%arg0: i32, %arg1: i32) -> (i32, i32) {
    %c0_i32 = arith.constant 0 : i32
    %c0_i32_0 = arith.constant 0 : i32
    return %c0_i32, %arg1 : i32, i32
  }
  func.func @transform_2(%arg0: i32, %arg1: i32) -> (i32, i32) {
    %c0_i32 = arith.constant 0 : i32
    %c0_i32_0 = arith.constant 0 : i32
    return %c0_i32, %arg1 : i32, i32
  }
  func.func @transform_3(%arg0: i32, %arg1: i32) -> (i32, i32) {
    %c0_i32 = arith.constant 0 : i32
    %c0_i32_0 = arith.constant 0 : i32
    return %arg1, %c0_i32 : i32, i32
  }
  func.func @transform_4(%arg0: i32, %arg1: i32) -> (i32, i32) {
    %c0_i32 = arith.constant 0 : i32
    %c0_i32_0 = arith.constant 0 : i32
    %c0_i32_1 = arith.constant 0 : i32
    return %c0_i32, %c0_i32_0 : i32, i32
  }
  func.func @transform_5(%arg0: i32, %arg1: i32) -> (i32, i32) {
    %c0_i32 = arith.constant 0 : i32
    %c0_i32_0 = arith.constant 0 : i32
    return %arg0, %c0_i32 : i32, i32
  }
}

</mosaic_0001>

<llo_original>
// kernel: tpu_custom_call.1
$region0: #{tpu_custom_call.1}
  #allocation0 [shape = 'u32[]', space=smem, size = 0x4, offset = 0x4, fixed_abs, tag = 'smem constant byte address 0x4 - core index']
  #allocation1 [shape = 'u32[72,128]{1,0:T(1,128)}', space=vmem, size = 0x9000, scoped, tag = 'internal scratch']
  #allocation2 [shape = 'f32[8,128]{1,0:T(8,128)}', space=vmem, size = 0x1000, scoped, tag = 'scratch operand']
  %s0 = inlined_call_operand.hbm [shape: f32[16,32], index: 0, kind: input, shape index: {}]
  %s1 = inlined_call_operand.hbm [shape: f32[32,64], index: 1, kind: input, shape index: {}]
  %s2 = inlined_call_operand.vmem [shape: f32[1,64], index: 2, kind: input, shape index: {}]
  %s3 = inlined_call_operand.hbm [shape: f32[64,128], index: 3, kind: input, shape index: {}]
  %s4 = inlined_call_operand.vmem [shape: f32[1,128], index: 4, kind: input, shape index: {}]
  %s5 = inlined_call_operand.hbm [shape: f32[16,128], index: 5, kind: output, shape index: {}]
  %s6 = sld [smem:[#allocation0]]
  $region73: #{tpu_custom_call.1} parent=0
    _
  %s8 = ssub.s32 1, %s6
  %s9 = scalar_select 0, %s8, %s6
  $region1: #{tpu_custom_call.1} parent=0
    #allocation3 [shape = 'u8[8192]{0}', space=vmem, size = 0x2000, scoped, tag = 'input window, operand 0']
    #allocation4 [shape = 's32[2]{0}', space=sflag, size = 0x8, scoped, tag = 'scoped memory for tpu_custom_call.1']
    #allocation5 [shape = 's32[2]{0}', space=sflag, size = 0x8, scoped, tag = 'scoped memory for tpu_custom_call.1']
    #allocation6 [shape = 'u8[16384]{0}', space=vmem, size = 0x4000, scoped, tag = 'input window, operand 1, single buffered']
    #allocation7 [shape = 's32[1]{0}', space=sflag, size = 0x4, scoped, tag = 'scoped memory for tpu_custom_call.1']
    #allocation8 [shape = 'u8[32768]{0}', space=vmem, size = 0x8000, scoped, tag = 'input window, operand 3, single buffered']
    #allocation9 [shape = 'u8[8192]{0}', space=vmem, size = 0x2000, scoped, tag = 'output window, operand 0']
    %10 = vsyncpa [#allocation4], 0
    %s11 = scalar_lea.sflag [#allocation4], 1
    %12 = vsyncpa %s11, 0
    %13 = vsyncpa [#allocation7], 0
    %14 = vsyncpa [#allocation5], 0
    %s15 = scalar_lea.sflag [#allocation5], 1
    %16 = vsyncpa %s15, 0
    loop: start=0, step=1, limit=4
    $region2: #{tpu_custom_call.1} parent=1 // loop_pre_header
      _
    $region3: #{tpu_custom_call.1} parent=1 // loop_header
      %s18 = sphi 0, %s22
      %p19 = scmp.ge.s32.totalorder %s18, 4
      %s25 = sphi 0, %s37
      %s26 = sphi 0, %s33
      %s27 = sphi 0, %s25
      %s28 = sphi 0, %s26
      %s29 = sphi 0, %s27
      %s30 = sphi 0, %s28
      %s40 = sphi 0, %s42
      %s43 = sphi 0, %s40
      %s44 = sphi 0, %s43
      %s60 = sphi 0, %s44
      %s66 = sphi 0, %s68
      %s69 = sphi 0, %s66
      %s70 = sphi 0, %s69
      %s86 = sphi 0, %s70
      %s92 = sphi 0, %s94
      %s95 = sphi 0, %s92
      %s96 = sphi 0, %s95
      %s112 = sphi 0, %s96
      %s118 = sphi 0, %s120
      %s121 = sphi 0, %s118
      %s122 = sphi 0, %s121
      %s138 = sphi 0, %s122
      %s142 = sphi 0, %s142
      %s144 = sphi 0, %s142
      %s145 = sphi 0, %s144
      %s159 = sphi 0, %s145
      %s165 = sphi 0, %s167
      %s168 = sphi 0, %s165
      %s169 = sphi 0, %s168
      %s185 = sphi 0, %s169
    $region4: #{tpu_custom_call.1} parent=1 // loop_header_branch
      %21 = sbr.rel (%p19) target = $region8
    $region5: #{tpu_custom_call.1} parent=1 // loop_body
      %s23 = ssub.s32 %s18, 1
      %s24 = ssub.s32 %s18, 2
      %s31 = sadd.s32 1, %s26
      %p32 = scmp.ge.s32.totalorder %s31, 1
      %s33 = scalar_select %p32, 0, %s31
      %s34 = sadd.s32 1, %s25
      %s35 = scalar_select %p32, %s34, %s25
      %p36 = scmp.ge.s32.totalorder %s35, 2
      %s37 = scalar_select %p36, 0, %s35
      %s38 = ssub.s32 %s25, %s37
      %p39 = scmp.eq.s32.totalorder %s38, 0
      %s41 = sadd.s32 %s40, 1
      %s42 = scalar_select %p39, %s40, %s41
      %p45 = pneg %p39
      %p46 = scmp.eq.s32.totalorder %s18, 1
      %p47 = por %p45, %p46
      %p48 = scmp.ne.s32.totalorder %s40, %s43
      %p49 = scmp.eq.s32.totalorder %s18, 0
      %p50 = por %p48, %p49
      %p51 = scmp.ne.s32.totalorder %s40, %s43
      %p52 = scmp.eq.s32.totalorder %s23, 1
      %p53 = por %p51, %p52
      %p54 = scmp.ne.s32.totalorder %s43, %s44
      %p55 = scmp.eq.s32.totalorder %s23, 0
      %p56 = por %p54, %p55
      %p57 = scmp.ne.s32.totalorder %s43, %s44
      %p58 = scmp.eq.s32.totalorder %s24, 1
      %p59 = por %p57, %p58
      %p61 = scmp.ne.s32.totalorder %s44, %s60
      %p62 = scmp.eq.s32.totalorder %s24, 0
      %p63 = por %p61, %p62
      %s64 = ssub.s32 %s26, %s33
      %p65 = scmp.eq.s32.totalorder %s64, 0
      %s67 = sadd.s32 %s66, 1
      %s68 = scalar_select %p65, %s66, %s67
      %p71 = pneg %p65
      %p72 = scmp.eq.s32.totalorder %s18, 1
      %p73 = por %p71, %p72
      %p74 = scmp.ne.s32.totalorder %s66, %s69
      %p75 = scmp.eq.s32.totalorder %s18, 0
      %p76 = por %p74, %p75
      %p77 = scmp.ne.s32.totalorder %s66, %s69
      %p78 = scmp.eq.s32.totalorder %s23, 1
      %p79 = por %p77, %p78
      %p80 = scmp.ne.s32.totalorder %s69, %s70
      %p81 = scmp.eq.s32.totalorder %s23, 0
      %p82 = por %p80, %p81
      %p83 = scmp.ne.s32.totalorder %s69, %s70
      %p84 = scmp.eq.s32.totalorder %s24, 1
      %p85 = por %p83, %p84
      %p87 = scmp.ne.s32.totalorder %s70, %s86
      %p88 = scmp.eq.s32.totalorder %s24, 0
      %p89 = por %p87, %p88
      %s90 = ssub.s32 %s26, %s33
      %p91 = scmp.eq.s32.totalorder %s90, 0
      %s93 = sadd.s32 %s92, 1
      %s94 = scalar_select %p91, %s92, %s93
      %p97 = pneg %p91
      %p98 = scmp.eq.s32.totalorder %s18, 1
      %p99 = por %p97, %p98
      %p100 = scmp.ne.s32.totalorder %s92, %s95
      %p101 = scmp.eq.s32.totalorder %s18, 0
      %p102 = por %p100, %p101
      %p103 = scmp.ne.s32.totalorder %s92, %s95
      %p104 = scmp.eq.s32.totalorder %s23, 1
      %p105 = por %p103, %p104
      %p106 = scmp.ne.s32.totalorder %s95, %s96
      %p107 = scmp.eq.s32.totalorder %s23, 0
      %p108 = por %p106, %p107
      %p109 = scmp.ne.s32.totalorder %s95, %s96
      %p110 = scmp.eq.s32.totalorder %s24, 1
      %p111 = por %p109, %p110
      %p113 = scmp.ne.s32.totalorder %s96, %s112
      %p114 = scmp.eq.s32.totalorder %s24, 0
      %p115 = por %p113, %p114
      %s116 = ssub.s32 %s26, %s33
      %p117 = scmp.eq.s32.totalorder %s116, 0
      %s119 = sadd.s32 %s118, 1
      %s120 = scalar_select %p117, %s118, %s119
      %p123 = pneg %p117
      %p124 = scmp.eq.s32.totalorder %s18, 1
      %p125 = por %p123, %p124
      %p126 = scmp.ne.s32.totalorder %s118, %s121
      %p127 = scmp.eq.s32.totalorder %s18, 0
      %p128 = por %p126, %p127
      %p129 = scmp.ne.s32.totalorder %s118, %s121
      %p130 = scmp.eq.s32.totalorder %s23, 1
      %p131 = por %p129, %p130
      %p132 = scmp.ne.s32.totalorder %s121, %s122
      %p133 = scmp.eq.s32.totalorder %s23, 0
      %p134 = por %p132, %p133
      %p135 = scmp.ne.s32.totalorder %s121, %s122
      %p136 = scmp.eq.s32.totalorder %s24, 1
      %p137 = por %p135, %p136
      %p139 = scmp.ne.s32.totalorder %s122, %s138
      %p140 = scmp.eq.s32.totalorder %s24, 0
      %p141 = por %p139, %p140
      %s143 = sadd.s32 %s142, 1
      %p146 = scmp.eq.s32.totalorder %s18, 1
      %p147 = scmp.ne.s32.totalorder %s142, %s144
      %p148 = scmp.eq.s32.totalorder %s18, 0
      %p149 = por %p147, %p148
      %p150 = scmp.ne.s32.totalorder %s142, %s144
      %p151 = scmp.eq.s32.totalorder %s23, 1
      %p152 = por %p150, %p151
      %p153 = scmp.ne.s32.totalorder %s144, %s145
      %p154 = scmp.eq.s32.totalorder %s23, 0
      %p155 = por %p153, %p154
      %p156 = scmp.ne.s32.totalorder %s144, %s145
      %p157 = scmp.eq.s32.totalorder %s24, 1
      %p158 = por %p156, %p157
      %p160 = scmp.ne.s32.totalorder %s145, %s159
      %p161 = scmp.eq.s32.totalorder %s24, 0
      %p162 = por %p160, %p161
      %s163 = ssub.s32 %s25, %s37
      %p164 = scmp.eq.s32.totalorder %s163, 0
      %s166 = sadd.s32 %s165, 1
      %s167 = scalar_select %p164, %s165, %s166
      %p170 = pneg %p164
      %p171 = scmp.eq.s32.totalorder %s18, 1
      %p172 = por %p170, %p171
      %p173 = scmp.ne.s32.totalorder %s165, %s168
      %p174 = scmp.eq.s32.totalorder %s18, 0
      %p175 = por %p173, %p174
      %p176 = scmp.ne.s32.totalorder %s165, %s168
      %p177 = scmp.eq.s32.totalorder %s23, 1
      %p178 = por %p176, %p177
      %p179 = scmp.ne.s32.totalorder %s168, %s169
      %p180 = scmp.eq.s32.totalorder %s23, 0
      %p181 = por %p179, %p180
      %p182 = scmp.ne.s32.totalorder %s168, %s169
      %p183 = scmp.eq.s32.totalorder %s24, 1
      %p184 = por %p182, %p183
      %p186 = scmp.ne.s32.totalorder %s169, %s185
      %p187 = scmp.eq.s32.totalorder %s24, 0
      %p188 = por %p186, %p187
      %p189 = scmp.le.s32.totalorder 1, %s18
      %p190 = scmp.lt.s32.totalorder %s18, 3
      %p191 = pnand %p189, %p190
      %p192 = pneg %p191
      // Predicated region
      $region9: #{tpu_custom_call.1} parent=5 // pred_check
        _
      $region10: #{tpu_custom_call.1} parent=5 // pred_check_branch
        %194 = sbr.rel (%p191) target = $region12
      $region11: #{tpu_custom_call.1} parent=5 // pred_region
        %s195 = ssub.s32 %s18, 1
        // Predicated region
        $region13: #{tpu_custom_call.1} parent=11 // pred_check
          %p196 = pneg %p82
        $region14: #{tpu_custom_call.1} parent=11 // pred_check_branch
          %198 = sbr.rel (%p196) target = $region16
        $region15: #{tpu_custom_call.1} parent=11 // pred_region
          %200 = vsyncadd [#allocation7], 0
          %s201 = smul.addr %s28, 8
          %s202 = scalar_lea.hbm %s1, %s201
          %s203 = sshll.u32 %s202, 4
          %s204 = int_to_ptr.hbm [resolvable:$true] %s203
          %s205 = sshll.u32 [#allocation6], 4
          %s206 = int_to_ptr.vmem [resolvable:$true] %s205
          %211 = dma.hbm_to_vmem [thread:$0]  %s204, 512, %s206, [#allocation7], 128, 128, 8
        $region16: #{tpu_custom_call.1} parent=11 // pred_fallthru
          _
        // Predicated region
        $region17: #{tpu_custom_call.1} parent=11 // pred_check
          %p212 = pneg %p108
        $region18: #{tpu_custom_call.1} parent=11 // pred_check_branch
          %214 = sbr.rel (%p212) target = $region20
        $region19: #{tpu_custom_call.1} parent=11 // pred_region
          %p215 = scmp.lt.s32.totalorder %s28, 0
          %s216 = scalar_select %p215, %s28, 0
          %s217 = scalar_lea.vmem %s2, %s216
        $region20: #{tpu_custom_call.1} parent=11 // pred_fallthru
          _
        // Predicated region
        $region21: #{tpu_custom_call.1} parent=11 // pred_check
          %p218 = pneg %p134
        $region22: #{tpu_custom_call.1} parent=11 // pred_check_branch
          %220 = sbr.rel (%p218) target = $region24
        $region23: #{tpu_custom_call.1} parent=11 // pred_region
          %s221 = smul.u32 8, %s28
          %223 = vsyncadd [#allocation7], 0
          %s224 = smul.addr %s221, 8
          %s225 = scalar_lea.hbm %s3, %s224
          %s226 = sshll.u32 %s225, 4
          %s227 = int_to_ptr.hbm [resolvable:$true] %s226
          %s228 = sshll.u32 [#allocation8], 4
          %s229 = int_to_ptr.vmem [resolvable:$true] %s228
          %234 = dma.hbm_to_vmem [thread:$0]  %s227, 1024, %s229, [#allocation7], 128, 128, 8
        $region24: #{tpu_custom_call.1} parent=11 // pred_fallthru
          _
        // Predicated region
        $region25: #{tpu_custom_call.1} parent=11 // pred_check
          %p235 = pneg %p155
        $region26: #{tpu_custom_call.1} parent=11 // pred_check_branch
          %237 = sbr.rel (%p235) target = $region28
        $region27: #{tpu_custom_call.1} parent=11 // pred_region
          _
        $region28: #{tpu_custom_call.1} parent=11 // pred_fallthru
          _
      $region12: #{tpu_custom_call.1} parent=5 // pred_fallthru
        _
      %p238 = scmp.lt.s32.totalorder %s18, 2
      // Predicated region
      $region29: #{tpu_custom_call.1} parent=5 // pred_check
        %p239 = pneg %p238
      $region30: #{tpu_custom_call.1} parent=5 // pred_check_branch
        %241 = sbr.rel (%p239) target = $region32
      $region31: #{tpu_custom_call.1} parent=5 // pred_region
        // Predicated region
        $region33: #{tpu_custom_call.1} parent=31 // pred_check
          %p242 = pneg %p50
        $region34: #{tpu_custom_call.1} parent=31 // pred_check_branch
          %244 = sbr.rel (%p242) target = $region36
        $region35: #{tpu_custom_call.1} parent=31 // pred_region
          %s245 = sand.u32 %s40, 1
          %s246 = scalar_lea.sflag [#allocation4], %s245
          %s247 = sand.u32 %s40, 1
          %s248 = smul.addr %s247, 8
          %s249 = scalar_lea.vmem [#allocation3], %s248
          %251 = vsyncadd %s246, 0
          %s252 = smul.addr %s25, 8
          %s253 = scalar_lea.hbm %s0, %s252
          %s255 = sshll.u32 %s253, 4
          %s256 = int_to_ptr.hbm [resolvable:$true] %s255
          %s257 = sshll.u32 %s249, 4
          %s258 = int_to_ptr.vmem [resolvable:$true] %s257
          %260 = dma.hbm_to_vmem [thread:$0]  %s256, 128, %s258, %s246
        $region36: #{tpu_custom_call.1} parent=31 // pred_fallthru
          _
      $region32: #{tpu_custom_call.1} parent=5 // pred_fallthru
        _
      %p261 = scmp.le.s32.totalorder 1, %s18
      %p262 = scmp.lt.s32.totalorder %s18, 3
      %p263 = pnand %p261, %p262
      %p264 = pneg %p263
      // Predicated region
      $region37: #{tpu_custom_call.1} parent=5 // pred_check
        _
      $region38: #{tpu_custom_call.1} parent=5 // pred_check_branch
        %266 = sbr.rel (%p263) target = $region40
      $region39: #{tpu_custom_call.1} parent=5 // pred_region
        %s267 = ssub.s32 %s18, 1
        %s268 = sand.u32 %s43, 1
        %s269 = scalar_lea.sflag [#allocation4], %s268
        %s270 = sand.u32 %s43, 1
        %s271 = smul.addr %s270, 8
        %s272 = scalar_lea.vmem [#allocation3], %s271
        // Predicated region
        $region41: #{tpu_custom_call.1} parent=39 // pred_check
          %p273 = pneg %p56
        $region42: #{tpu_custom_call.1} parent=39 // pred_check_branch
          %275 = sbr.rel (%p273) target = $region44
        $region43: #{tpu_custom_call.1} parent=39 // pred_region
          %277 = dma.done %s269, 128
        $region44: #{tpu_custom_call.1} parent=39 // pred_fallthru
          _
        // Predicated region
        $region45: #{tpu_custom_call.1} parent=39 // pred_check
          %p278 = pneg %p82
        $region46: #{tpu_custom_call.1} parent=39 // pred_check_branch
          %280 = sbr.rel (%p278) target = $region48
        $region47: #{tpu_custom_call.1} parent=39 // pred_region
          %282 = dma.done [#allocation7], 512
        $region48: #{tpu_custom_call.1} parent=39 // pred_fallthru
          _
        // Predicated region
        $region49: #{tpu_custom_call.1} parent=39 // pred_check
          %p283 = pneg %p134
        $region50: #{tpu_custom_call.1} parent=39 // pred_check_branch
          %285 = sbr.rel (%p283) target = $region52
        $region51: #{tpu_custom_call.1} parent=39 // pred_region
          %287 = dma.done [#allocation7], 1024
        $region52: #{tpu_custom_call.1} parent=39 // pred_fallthru
          _
        %s288 = sand.u32 %s43, 1
        %s289 = scalar_lea.sflag [#allocation4], %s288
        %s290 = sand.u32 %s43, 1
        %s291 = smul.addr %s290, 8
        %s292 = scalar_lea.vmem [#allocation3], %s291
        %p293 = pneg %p56
        %p294 = pneg %p53
        %p295 = pneg %p82
        %p296 = pneg %p79
        %p297 = scmp.lt.s32.totalorder %s28, 0
        %s298 = scalar_select %p297, %s28, 0
        %s299 = scalar_lea.vmem %s2, %s298
        %p300 = pneg %p108
        %p301 = pneg %p105
        %p302 = pneg %p134
        %p303 = pneg %p131
        %p304 = pneg %p155
        %p305 = pneg %p152
        %p306 = pneg %p181
        %p307 = pneg %p178
        %s308 = sand.u32 %s168, 1
        %s309 = scalar_lea.sflag [#allocation5], %s308
        %s310 = sand.u32 %s168, 1
        %s311 = smul.addr %s310, 8
        %s312 = scalar_lea.vmem [#allocation9], %s311
        %p313 = scmp.lt.s32.totalorder %s28, 0
        %s314 = scalar_select %p313, %s28, 0
        %s315 = scalar_lea.vmem %s2, %s314
        %s316 = smul.u32 8, %s28
        %p317 = scmp.eq.s32.totalorder %s28, 0
        // Predicated region
        $region53: #{tpu_custom_call.1} parent=39 // pred_check
          %p318 = pneg %p317
        $region54: #{tpu_custom_call.1} parent=39 // pred_check_branch
          %320 = sbr.rel (%p318) target = $region56
        $region55: #{tpu_custom_call.1} parent=39 // pred_region
          %321 = vst [vmem:[#allocation2] sm:$0xff] 0.0
        $region56: #{tpu_custom_call.1} parent=39 // pred_fallthru
          _
        %v322 = vld [vmem:[%s272] sm:$0xff]
        %v323 = vld [vmem:[#allocation6] sm:$0xff]
        %v324 = vld [vmem:[#allocation6 + $0x8] sm:$0xff]
        %v325 = vld [vmem:[#allocation6 + $0x10] sm:$0xff]
        %v326 = vld [vmem:[#allocation6 + $0x18] sm:$0xff]
        %v327 = vld [vmem:[%s315] sm:$0x1]
        %v329 = vperm.slane %v327, 0
        %vm331 = vcmask 261120
        %v333 = vsel %vm331, %v322, 0
        %335 = vmatpush.msra.mxu0 0.0
        %336 = vmatpush.msra.mxu0 0.0
        %337 = vmatpush.msra.mxu0 0.0
        %338 = vmatpush.msra.mxu0 0.0
        %339 = vmatpush.msra.mxu0 0.0
        %340 = vmatpush.msra.mxu0 0.0
        %341 = vmatpush.msra.mxu0 0.0
        %342 = vmatpush.msra.mxu0 0.0
        %343 = vmatpush.msra.mxu0 0.0
        %344 = vmatpush.msra.mxu0 0.0
        %345 = vmatpush.msra.mxu0 0.0
        %346 = vmatpush.msra.mxu0 0.0
        %347 = vmatpush.msra.mxu0 %v326
        %348 = vmatpush.msra.mxu0 %v325
        %349 = vmatpush.msra.mxu0 %v324
        %350 = vmatpush.msra.mxu0 %v323
        %351 = vmatmul.f32.gmra.mxu0 %v333
        %v352 = vpop.f32.mrf.mxu0
        %v353 = vadd.f32 %v329, %v352
        %354 = vdwg.mxu0
        %v355 = vmul.f32 %v353, 0.5
        %v356 = vmul.f32 %v353, 0.70710677
        %v357 = vmul.f32 %v356, %v356
        %v358 = vmin.f32 16.0, %v357
        %v359 = vmul.f32 %v358, 2.1237322e-06
        %v360 = vadd.f32 %v359, 0.00028619796
        %v361 = vmul.f32 %v358, %v360
        %v362 = vadd.f32 %v361, 0.0036580483
        %v363 = vmul.f32 %v358, %v362
        %v364 = vadd.f32 %v363, 0.05243302
        %v365 = vmul.f32 %v358, %v364
        %v366 = vadd.f32 %v365, 0.18741608
        %v367 = vmul.f32 %v358, %v366
        %v368 = vadd.f32 %v367, 1.1283791
        %v369 = vmul.f32 %v356, %v368
        %v370 = vmul.f32 %v358, 3.8918573e-05
        %v371 = vadd.f32 %v370, 0.001143296
        %v372 = vmul.f32 %v358, %v371
        %v373 = vadd.f32 %v372, 0.014752088
        %v374 = vmul.f32 %v358, %v373
        %v375 = vadd.f32 %v374, 0.112945676
        %v376 = vmul.f32 %v358, %v375
        %v377 = vadd.f32 %v376, 0.4994258
        %v378 = vmul.f32 %v358, %v377
        %v379 = vadd.f32 %v378, 1.0
        %v380 = vrcp.pop %v379
        %v381 = vmul.f32 %v379, %v380
        %v382 = vsub.f32 1.0, %v381
        %v383 = vmul.f32 %v380, %v382
        %v384 = vadd.f32 %v380, %v383
        %vm385 = vweird.f32 %v379
        %vm386 = vweird.f32 %v380
        %vm387 = vmor %vm385, %vm386
        %v388 = vsel %vm387, %v380, %v384
        %v389 = vand.u32 2147483647, %v379
        %vm390 = vcmp.eq.f32.partialorder %v389, 8.507059e+37
        %v391 = vand.u32 %v379, 2147483648
        %v392 = vor.u32 1.1754944e-38, %v391
        %v393 = vsel %vm390, %v392, %v388
        %v394 = vmul.f32 %v369, %v393
        %v395 = vmin.f32 %v394, 1.0
        %v396 = vmax.f32 %v395, -1.0
        %v397 = vadd.f32 %v396, 1.0
        %v398 = vmul.f32 %v355, %v397
        %v399 = vld [vmem:[#allocation2] sm:$0xff]
        %v400 = vld [vmem:[#allocation8] sm:$0xff]
        %v401 = vld [vmem:[#allocation8 + $0x8] sm:$0xff]
        %v402 = vld [vmem:[#allocation8 + $0x10] sm:$0xff]
        %v403 = vld [vmem:[#allocation8 + $0x18] sm:$0xff]
        %v404 = vld [vmem:[#allocation8 + $0x20] sm:$0xff]
        %v405 = vld [vmem:[#allocation8 + $0x28] sm:$0xff]
        %v406 = vld [vmem:[#allocation8 + $0x30] sm:$0xff]
        %v407 = vld [vmem:[#allocation8 + $0x38] sm:$0xff]
        %vm408 = vcmask 523264
        %v410 = vsel %vm408, %v398, 0
        %412 = vmatpush.msra.mxu0 0.0
        %413 = vmatpush.msra.mxu0 0.0
        %414 = vmatpush.msra.mxu0 0.0
        %415 = vmatpush.msra.mxu0 0.0
        %416 = vmatpush.msra.mxu0 0.0
        %417 = vmatpush.msra.mxu0 0.0
        %418 = vmatpush.msra.mxu0 0.0
        %419 = vmatpush.msra.mxu0 0.0
        %420 = vmatpush.msra.mxu0 %v407
        %421 = vmatpush.msra.mxu0 %v406
        %422 = vmatpush.msra.mxu0 %v405
        %423 = vmatpush.msra.mxu0 %v404
        %424 = vmatpush.msra.mxu0 %v403
        %425 = vmatpush.msra.mxu0 %v402
        %426 = vmatpush.msra.mxu0 %v401
        %427 = vmatpush.msra.mxu0 %v400
        %428 = vmatmul.f32.gmra.mxu0 %v410
        %v429 = vpop.f32.mrf.mxu0
        %v430 = vadd.f32 0.0, %v429
        %431 = vdwg.mxu0
        %v432 = vadd.f32 %v399, %v430
        %433 = vst [vmem:[#allocation2] sm:$0xff] %v432
        // Predicated region
        $region57: #{tpu_custom_call.1} parent=39 // pred_check
          %p434 = pneg %p317
        $region58: #{tpu_custom_call.1} parent=39 // pred_check_branch
          %436 = sbr.rel (%p434) target = $region60
        $region59: #{tpu_custom_call.1} parent=39 // pred_region
          %v437 = vld [vmem:[#allocation2] sm:$0xff]
          %v438 = vld [vmem:[%s4] sm:$0x1]
          %v440 = vperm.slane %v438, 0
          %v442 = vadd.f32 %v437, %v440
          %443 = vst [vmem:[%s312] sm:$0xff] %v442
        $region60: #{tpu_custom_call.1} parent=39 // pred_fallthru
          _
        %s444 = sand.u32 %s168, 1
        %s445 = scalar_lea.sflag [#allocation5], %s444
        %s446 = sand.u32 %s168, 1
        %s447 = smul.addr %s446, 8
        %s448 = scalar_lea.vmem [#allocation9], %s447
        // Predicated region
        $region61: #{tpu_custom_call.1} parent=39 // pred_check
          %p449 = pneg %p178
        $region62: #{tpu_custom_call.1} parent=39 // pred_check_branch
          %451 = sbr.rel (%p449) target = $region64
        $region63: #{tpu_custom_call.1} parent=39 // pred_region
          %453 = vsyncadd %s445, 0
          %s454 = smul.addr %s27, 8
          %s455 = scalar_lea.hbm %s5, %s454
          %s457 = sshll.u32 %s448, 4
          %s458 = int_to_ptr.vmem [resolvable:$true] %s457
          %s459 = sshll.u32 %s455, 4
          %s460 = int_to_ptr.hbm [resolvable:$true] %s459
          %462 = dma.vmem_to_hbm [thread:$0]  %s458, 128, %s460, %s445
        $region64: #{tpu_custom_call.1} parent=39 // pred_fallthru
          _
      $region40: #{tpu_custom_call.1} parent=5 // pred_fallthru
        _
      %p463 = scmp.le.s32.totalorder 2, %s18
      // Predicated region
      $region65: #{tpu_custom_call.1} parent=5 // pred_check
        %p464 = pneg %p463
      $region66: #{tpu_custom_call.1} parent=5 // pred_check_branch
        %466 = sbr.rel (%p464) target = $region68
      $region67: #{tpu_custom_call.1} parent=5 // pred_region
        %s467 = ssub.s32 %s18, 2
        // Predicated region
        $region69: #{tpu_custom_call.1} parent=67 // pred_check
          %p468 = pneg %p184
        $region70: #{tpu_custom_call.1} parent=67 // pred_check_branch
          %470 = sbr.rel (%p468) target = $region72
        $region71: #{tpu_custom_call.1} parent=67 // pred_region
          %s471 = sand.u32 %s169, 1
          %s472 = scalar_lea.sflag [#allocation5], %s471
          %s473 = sand.u32 %s169, 1
          %s474 = smul.addr %s473, 8
          %s475 = scalar_lea.vmem [#allocation9], %s474
          %477 = dma.done %s472, 128
        $region72: #{tpu_custom_call.1} parent=67 // pred_fallthru
          _
      $region68: #{tpu_custom_call.1} parent=5 // pred_fallthru
        _
    $region6: #{tpu_custom_call.1} parent=1 // loop_footer
      %s22 = sadd.s32 1, %s18
    $region7: #{tpu_custom_call.1} parent=1 // loop_footer_branch
      %17 = sbr.rel target = $region3
    $region8: #{tpu_custom_call.1} parent=1 // loop_exit
      _
    %478 = vsyncpa [#allocation4], 1
    %s479 = scalar_lea.sflag [#allocation4], 1
    %480 = vsyncpa %s479, 1
    %481 = vsyncpa [#allocation7], 1
    %482 = vsyncpa [#allocation5], 1
    %s483 = scalar_lea.sflag [#allocation5], 1
    %484 = vsyncpa %s483, 1

</llo_original>
